<compile_context>
chip_gen: v5e
topology: v5e:2x2
jax: 0.10.0
libtpu: 0.0.40
codegen_flags: <defaults>
</compile_context>

<pallas_src>
import functools

import jax
import jax.numpy as jnp
from jax.experimental import pallas as pl
from jax.experimental.pallas import tpu as pltpu

_LANE = 128
_SUBLANE = 8


def _round_up(v, m):
    return (v + m - 1) // m * m


def _pad2d(a, rows, cols):
    return jnp.pad(a, ((0, rows - a.shape[0]), (0, cols - a.shape[1])))


def _mdn_kernel(x_ref, w1_ref, b1_ref, w2_ref, b2_ref, vrow_ref, gate_ref,
                wf_ref, bf_ref,
                final_ref, reasoned_ref, gate_out_ref, metrics_ref,
                sum_acc, sq_acc, max_acc, abs_acc,
                *, batch, hidden, tile_b, inv_n, inv_nm1):
    """One batch tile of the fused forward pass.

    x_ref        [TILE_B, Dp]   padded input tile
    w1/b1        [Dp,Rp]/[1,Rp] reasoning MLP, first linear
    w2/b2        [Rp,Hp]/[1,Hp] reasoning MLP, second linear
    vrow_ref     [1,128]        validators in lanes 0..3 (mass/area/growth/dist)
    gate_ref     [1,Hp]         understanding_gate parameter (pre-sigmoid)
    wf/bf        [Hp,Hp]/[1,Hp] final_validation linear
    outputs:     final [TILE_B,Hp], reasoned [TILE_B,Hp], sigmoid(gate) [1,Hp],
                 metrics row [1,128] (lanes 0..3 metrics, lane 4 overall)
    scratch:     per-lane running sum / sumsq / max / sum|x| accumulators
    """
    i = pl.program_id(0)
    last = pl.num_programs(0) - 1

    @pl.when(i == 0)
    def _init():
        sum_acc[...] = jnp.zeros_like(sum_acc)
        sq_acc[...] = jnp.zeros_like(sq_acc)
        abs_acc[...] = jnp.zeros_like(abs_acc)
        max_acc[...] = jnp.full_like(max_acc, -jnp.inf)
        gate_out_ref[...] = jax.nn.sigmoid(gate_ref[...])

    mm_dtype = w1_ref.dtype  # f32, or bf16 when use_bf16 (v6e / v7x MXU)

    # --- reasoning layer: input -> reasoning_dim -> hidden (ReLU) -----------
    x = x_ref[...].astype(mm_dtype)
    h = jnp.dot(x, w1_ref[...], preferred_element_type=jnp.float32) + b1_ref[...]
    h = jnp.maximum(h, 0.0)
    reasoned = (jnp.dot(h.astype(mm_dtype), w2_ref[...],
                        preferred_element_type=jnp.float32) + b2_ref[...])
    reasoned_ref[...] = reasoned.astype(reasoned_ref.dtype)

    # --- running statistics over the *logical* (unpadded) region ------------
    row = jax.lax.broadcasted_iota(jnp.int32, reasoned.shape, 0) + i * tile_b
    col = jax.lax.broadcasted_iota(jnp.int32, reasoned.shape, 1)
    valid = (row < batch) & (col < hidden)

    z = jnp.where(valid, reasoned, 0.0)
    sum_acc[...] += jnp.sum(z, axis=0, keepdims=True)
    sq_acc[...] += jnp.sum(z * z, axis=0, keepdims=True)
    abs_acc[...] += jnp.sum(jnp.abs(z), axis=0, keepdims=True)
    zmax = jnp.where(valid, reasoned, -jnp.inf)
    max_acc[...] = jnp.maximum(max_acc[...],
                               jnp.max(zmax, axis=0, keepdims=True))

    # --- gating + final validation linear ------------------------------------
    gate = jax.nn.sigmoid(gate_ref[...])          # (1, Hp), EUP slot
    validated = gate * reasoned                   # broadcast over batch rows
    final_ref[...] = (jnp.dot(validated.astype(mm_dtype), wf_ref[...],
                              preferred_element_type=jnp.float32)
                      + bf_ref[...]).astype(final_ref.dtype)

    # --- finalize metrics on the last grid step ------------------------------
    @pl.when(i == last)
    def _finalize():
        total_sum = jnp.sum(sum_acc[...])
        total_sq = jnp.sum(sq_acc[...])
        total_abs = jnp.sum(abs_acc[...])
        total_max = jnp.max(max_acc[...])

        mean = total_sum * inv_n
        # unbiased variance (torch.std default, ddof=1), one-pass sum/sumsq
        var = (total_sq - total_sum * total_sum * inv_n) * inv_nm1
        std = jnp.sqrt(jnp.maximum(var, 0.0))
        mabs = total_abs * inv_n

        lane = jax.lax.broadcasted_iota(jnp.int32, metrics_ref.shape, 1)
        stats = jnp.where(lane == 0, mean,
                jnp.where(lane == 1, std,
                jnp.where(lane == 2, total_max, mabs)))
        m = jax.nn.sigmoid(vrow_ref[...] * stats)       # vectorized 4 sigmoids
        m = jnp.where(lane < 4, m, 0.0)
        overall = 0.25 * jnp.sum(m)
        metrics_ref[...] = m + jnp.where(lane == 4, overall, 0.0)


@functools.partial(jax.jit, static_argnames=("use_bf16",))
def multidisciplinary_understanding_forward(x, params, use_bf16=False):
    B, D = x.shape
    R = params["w1"].shape[1]
    H = params["gate"].shape[-1]

    Dp = _round_up(D, _LANE)
    Rp = _round_up(R, _LANE)
    Hp = _round_up(H, _LANE)

    # Batch tile: whole (sublane-padded) batch for small B, else 512-row tiles
    # (512-row tiles already sit near HBM roofline and fit v7x's 64 MiB VMEM
    # with double buffering).
    tile_b = 512 if B > 512 else _round_up(B, _SUBLANE)
    Bp = _round_up(B, tile_b)
    n_tiles = Bp // tile_b

    f32 = jnp.float32
    w_dtype = jnp.bfloat16 if use_bf16 else f32

    xp = _pad2d(x.astype(f32), Bp, Dp)
    w1 = _pad2d(params["w1"].astype(w_dtype), Dp, Rp)
    b1 = _pad2d(params["b1"].astype(f32), 1, Rp)
    w2 = _pad2d(params["w2"].astype(w_dtype), Rp, Hp)
    b2 = _pad2d(params["b2"].astype(f32), 1, Hp)
    gate = _pad2d(params["gate"].astype(f32), 1, Hp)
    wf = _pad2d(params["wf"].astype(w_dtype), Hp, Hp)
    bf = _pad2d(params["bf"].astype(f32), 1, Hp)
    vrow = jnp.zeros((1, _LANE), f32).at[0, :4].set(
        params["validators"].astype(f32))

    n = B * H                                   # logical element count
    inv_n = 1.0 / float(n)
    inv_nm1 = 1.0 / float(max(n - 1, 1))

    kernel = functools.partial(_mdn_kernel, batch=B, hidden=H, tile_b=tile_b,
                               inv_n=inv_n, inv_nm1=inv_nm1)

    const = lambda i: (0, 0)
    batch_tile = lambda i: (i, 0)

    in_specs = [
        pl.BlockSpec((tile_b, Dp), batch_tile),  # x (pipelined over batch)
        pl.BlockSpec((Dp, Rp), const),           # w1 (VMEM-resident)
        pl.BlockSpec((1, Rp), const),            # b1
        pl.BlockSpec((Rp, Hp), const),           # w2
        pl.BlockSpec((1, Hp), const),            # b2
        pl.BlockSpec((1, _LANE), const),         # validators row
        pl.BlockSpec((1, Hp), const),            # understanding_gate
        pl.BlockSpec((Hp, Hp), const),           # final_validation weight
        pl.BlockSpec((1, Hp), const),            # final_validation bias
    ]
    out_specs = (
        pl.BlockSpec((tile_b, Hp), batch_tile),  # final_output
        pl.BlockSpec((tile_b, Hp), batch_tile),  # reasoned_output
        pl.BlockSpec((1, Hp), const),            # sigmoid(understanding_gate)
        pl.BlockSpec((1, _LANE), const),         # metrics row
    )
    out_shape = (
        jax.ShapeDtypeStruct((Bp, Hp), f32),
        jax.ShapeDtypeStruct((Bp, Hp), f32),
        jax.ShapeDtypeStruct((1, Hp), f32),
        jax.ShapeDtypeStruct((1, _LANE), f32),
    )
    scratch_shapes = [
        pltpu.VMEM((1, Hp), f32),   # running per-lane sum
        pltpu.VMEM((1, Hp), f32),   # running per-lane sum of squares
        pltpu.VMEM((1, Hp), f32),   # running per-lane max
        pltpu.VMEM((1, Hp), f32),   # running per-lane sum of |x|
    ]

    # VMEM budget: double-buffered tiles + resident weights, with headroom.
    wbytes = 2 if use_bf16 else 4
    tile_bytes = (tile_b * Dp * 4 + 2 * tile_b * Hp * 4 + tile_b * Rp * 4
                  + (Dp * Rp + Rp * Hp + Hp * Hp) * wbytes
                  + (Rp + 4 * Hp + 2 * _LANE) * 4)
    vmem_limit = int(min(max(2 * tile_bytes + 64 * 1024, 32 * 1024 * 1024),
                         48 * 1024 * 1024))

    inputs = (xp, w1, b1, w2, b2, vrow, gate, wf, bf)
    in_bytes = sum(int(a.size) * a.dtype.itemsize for a in inputs)
    out_bytes = 4 * (2 * Bp * Hp + Hp + _LANE)
    cost = pl.CostEstimate(
        flops=2 * B * (D * R + R * H + H * H) + 10 * B * H,
        transcendentals=n_tiles * Hp + 2 * _LANE,
        bytes_accessed=in_bytes + out_bytes,
    )

    final_p, reasoned_p, gate_p, metrics_p = pl.pallas_call(
        kernel,
        out_shape=out_shape,
        grid_spec=pltpu.PrefetchScalarGridSpec(
            num_scalar_prefetch=0,
            grid=(n_tiles,),
            in_specs=in_specs,
            out_specs=out_specs,
            scratch_shapes=scratch_shapes),
        compiler_params=pltpu.CompilerParams(
            # metric accumulators + resident gate/metrics output blocks make
            # the batch axis a reduction -> must stay sequential.
            dimension_semantics=("arbitrary",),
            vmem_limit_bytes=vmem_limit),
        cost_estimate=cost,
    )(*inputs)

    metrics_row = metrics_p[0]
    info = {
        "reasoned_output": reasoned_p[:B, :H],
        "understanding_metrics": {
            "physical_coherence": metrics_row[0],
            "geometric_validity": metrics_row[1],
            "financial_feasibility": metrics_row[2],
            "statistical_significance": metrics_row[3],
            "overall_understanding": metrics_row[4],
        },
        "validation_gate": gate_p[0, :H],
    }
    return final_p[:B, :H], info


def init_params(key, input_size, hidden_size, reasoning_dimension):
    """Deterministic synthetic parameter init (shapes per the PyTorch module)."""
    ks = jax.random.split(key, 8)
    f32 = jnp.float32
    w1 = jax.random.normal(ks[0], (input_size, reasoning_dimension), f32) * 0.1
    b1 = jax.random.normal(ks[1], (1, reasoning_dimension), f32) * 0.1
    w2 = jax.random.normal(ks[2], (reasoning_dimension, hidden_size), f32) * 0.1
    b2 = jax.random.normal(ks[3], (1, hidden_size), f32) * 0.1
    validators = jax.random.normal(ks[4], (4,), f32)       # mass/area/growth/dist
    gate = jax.random.uniform(ks[5], (1, hidden_size), f32)  # torch.rand(hidden)
    wf = jax.random.normal(ks[6], (hidden_size, hidden_size), f32) * 0.1
    bf = jax.random.normal(ks[7], (1, hidden_size), f32) * 0.1
    return {"w1": w1, "b1": b1, "w2": w2, "b2": b2,
            "validators": validators, "gate": gate, "wf": wf, "bf": bf}


def _reference_forward(x, params):
    """Pure-JAX reference of the same forward pass (for a correctness check)."""
    h = jnp.maximum(x @ params["w1"] + params["b1"], 0.0)
    reasoned = h @ params["w2"] + params["b2"]
    mean = jnp.mean(reasoned)
    std = jnp.std(reasoned, ddof=1)
    mx = jnp.max(reasoned)
    mabs = jnp.mean(jnp.abs(reasoned))
    v = params["validators"]
    mets = jax.nn.sigmoid(jnp.stack([v[0] * mean, v[1] * std,
                                     v[2] * mx, v[3] * mabs]))
    gate = jax.nn.sigmoid(params["gate"])
    final = (gate * reasoned) @ params["wf"] + params["bf"]
    return final, reasoned, gate[0], mets


if __name__ == "__main__":
    input_size = 16
    hidden_size = 32
    reasoning_dimension = 64
    batch = 2

    key = jax.random.PRNGKey(0)
    k_x, k_p = jax.random.split(key)
    x = jax.random.normal(k_x, (batch, input_size), jnp.float32)
    params = init_params(k_p, input_size, hidden_size, reasoning_dimension)

    final_output, info = multidisciplinary_understanding_forward(x, params)
    jax.block_until_ready(final_output)
    jax.block_until_ready(info["understanding_metrics"]["overall_understanding"])

    assert final_output.shape == (batch, hidden_size)
    assert info["reasoned_output"].shape == (batch, hidden_size)
    assert info["validation_gate"].shape == (hidden_size,)

    ref_final, ref_reasoned, ref_gate, ref_mets = _reference_forward(x, params)
    mets = info["understanding_metrics"]
    got_mets = jnp.stack([mets["physical_coherence"],
                          mets["geometric_validity"],
                          mets["financial_feasibility"],
                          mets["statistical_significance"]])
    assert jnp.allclose(final_output, ref_final, atol=5e-3, rtol=5e-3)
    assert jnp.allclose(info["reasoned_output"], ref_reasoned, atol=5e-3, rtol=5e-3)
    assert jnp.allclose(info["validation_gate"], ref_gate, atol=1e-5)
    assert jnp.allclose(got_mets, ref_mets, atol=5e-3)
    assert jnp.allclose(mets["overall_understanding"], jnp.mean(ref_mets), atol=5e-3)

    print("KERNEL_OK")
</pallas_src>

<mosaic_0001>
module attributes {stable_mosaic.version = 11 : i64} {
  func.func @_mdn_kernel(%arg0: i32, %arg1: memref<8x128xf32, #tpu.memory_space<vmem>>, %arg2: memref<128x128xf32, #tpu.memory_space<vmem>>, %arg3: memref<1x128xf32, #tpu.memory_space<vmem>>, %arg4: memref<128x128xf32, #tpu.memory_space<vmem>>, %arg5: memref<1x128xf32, #tpu.memory_space<vmem>>, %arg6: memref<1x128xf32, #tpu.memory_space<vmem>>, %arg7: memref<1x128xf32, #tpu.memory_space<vmem>>, %arg8: memref<128x128xf32, #tpu.memory_space<vmem>>, %arg9: memref<1x128xf32, #tpu.memory_space<vmem>>, %arg10: memref<8x128xf32, #tpu.memory_space<vmem>>, %arg11: memref<8x128xf32, #tpu.memory_space<vmem>>, %arg12: memref<1x128xf32, #tpu.memory_space<vmem>>, %arg13: memref<1x128xf32, #tpu.memory_space<vmem>>, %arg14: memref<1x128xf32, #tpu.memory_space<vmem>>, %arg15: memref<1x128xf32, #tpu.memory_space<vmem>>, %arg16: memref<1x128xf32, #tpu.memory_space<vmem>>, %arg17: memref<1x128xf32, #tpu.memory_space<vmem>>) attributes {dimension_semantics = [#tpu.dimension_semantics<arbitrary>], iteration_bounds = array<i64: 1>, scalar_prefetch = 0 : i64, scratch_operands = 4 : i64, tpu.core_type = #tpu.core_type<tc>, window_params = [{transform_indices = @transform_0, window_bounds = array<i64: 8, 128>}, {pipeline_mode = #tpu.pipeline_mode<synchronous>, transform_indices = @transform_1, window_bounds = array<i64: 128, 128>}, {pipeline_mode = #tpu.pipeline_mode<synchronous>, transform_indices = @transform_2, window_bounds = array<i64: 1, 128>}, {pipeline_mode = #tpu.pipeline_mode<synchronous>, transform_indices = @transform_3, window_bounds = array<i64: 128, 128>}, {pipeline_mode = #tpu.pipeline_mode<synchronous>, transform_indices = @transform_4, window_bounds = array<i64: 1, 128>}, {pipeline_mode = #tpu.pipeline_mode<synchronous>, transform_indices = @transform_5, window_bounds = array<i64: 1, 128>}, {pipeline_mode = #tpu.pipeline_mode<synchronous>, transform_indices = @transform_6, window_bounds = array<i64: 1, 128>}, {pipeline_mode = #tpu.pipeline_mode<synchronous>, transform_indices = @transform_7, window_bounds = array<i64: 128, 128>}, {pipeline_mode = #tpu.pipeline_mode<synchronous>, transform_indices = @transform_8, window_bounds = array<i64: 1, 128>}, {transform_indices = @transform_9, window_bounds = array<i64: 8, 128>}, {transform_indices = @transform_10, window_bounds = array<i64: 8, 128>}, {pipeline_mode = #tpu.pipeline_mode<synchronous>, transform_indices = @transform_11, window_bounds = array<i64: 1, 128>}, {pipeline_mode = #tpu.pipeline_mode<synchronous>, transform_indices = @transform_12, window_bounds = array<i64: 1, 128>}]} {
    %c0_i32 = arith.constant 0 : i32
    %0 = arith.cmpi eq, %arg0, %c0_i32 : i32
    %1 = arith.extui %0 : i1 to i32
    %c0_i32_0 = arith.constant 0 : i32
    %2 = arith.cmpi ne, %1, %c0_i32_0 : i32
    scf.if %2 {
      %cst_48 = arith.constant 0.000000e+00 : f32
      %70 = vector.broadcast %cst_48 : f32 to vector<1x128xf32>
      %c0_49 = arith.constant 0 : index
      %c0_50 = arith.constant 0 : index
      %71 = vector.load %arg14[%c0_49, %c0_50] : memref<1x128xf32, #tpu.memory_space<vmem>>, vector<1x128xf32>
      tpu.vector_store %arg14[%c0_49, %c0_50], %70 {strides = array<i32>} : memref<1x128xf32, #tpu.memory_space<vmem>>, vector<1x128xf32>,
      %cst_51 = arith.constant 0.000000e+00 : f32
      %72 = vector.broadcast %cst_51 : f32 to vector<1x128xf32>
      %c0_52 = arith.constant 0 : index
      %c0_53 = arith.constant 0 : index
      %73 = vector.load %arg15[%c0_52, %c0_53] : memref<1x128xf32, #tpu.memory_space<vmem>>, vector<1x128xf32>
      tpu.vector_store %arg15[%c0_52, %c0_53], %72 {strides = array<i32>} : memref<1x128xf32, #tpu.memory_space<vmem>>, vector<1x128xf32>,
      %cst_54 = arith.constant 0.000000e+00 : f32
      %74 = vector.broadcast %cst_54 : f32 to vector<1x128xf32>
      %c0_55 = arith.constant 0 : index
      %c0_56 = arith.constant 0 : index
      %75 = vector.load %arg17[%c0_55, %c0_56] : memref<1x128xf32, #tpu.memory_space<vmem>>, vector<1x128xf32>
      tpu.vector_store %arg17[%c0_55, %c0_56], %74 {strides = array<i32>} : memref<1x128xf32, #tpu.memory_space<vmem>>, vector<1x128xf32>,
      %cst_57 = arith.constant 0xFF800000 : f32
      %76 = vector.broadcast %cst_57 : f32 to vector<1x128xf32>
      %c0_58 = arith.constant 0 : index
      %c0_59 = arith.constant 0 : index
      %77 = vector.load %arg16[%c0_58, %c0_59] : memref<1x128xf32, #tpu.memory_space<vmem>>, vector<1x128xf32>
      tpu.vector_store %arg16[%c0_58, %c0_59], %76 {strides = array<i32>} : memref<1x128xf32, #tpu.memory_space<vmem>>, vector<1x128xf32>,
      %c0_60 = arith.constant 0 : index
      %c0_61 = arith.constant 0 : index
      %78 = vector.load %arg7[%c0_60, %c0_61] : memref<1x128xf32, #tpu.memory_space<vmem>>, vector<1x128xf32>
      %79 = arith.negf %78 : vector<1x128xf32>
      %80 = math.exp %79 : vector<1x128xf32>
      %cst_62 = arith.constant 1.000000e+00 : f32
      %81 = vector.broadcast %cst_62 : f32 to vector<1x128xf32>
      %82 = arith.addf %81, %80 : vector<1x128xf32>
      %83 = arith.divf %81, %82 : vector<1x128xf32>
      %c0_63 = arith.constant 0 : index
      %c0_64 = arith.constant 0 : index
      %84 = vector.load %arg12[%c0_63, %c0_64] : memref<1x128xf32, #tpu.memory_space<vmem>>, vector<1x128xf32>
      tpu.vector_store %arg12[%c0_63, %c0_64], %83 {strides = array<i32>} : memref<1x128xf32, #tpu.memory_space<vmem>>, vector<1x128xf32>,
    } else {
    }
    %c0 = arith.constant 0 : index
    %c0_1 = arith.constant 0 : index
    %3 = vector.load %arg1[%c0, %c0_1] : memref<8x128xf32, #tpu.memory_space<vmem>>, vector<8x128xf32>
    %c0_2 = arith.constant 0 : index
    %c0_3 = arith.constant 0 : index
    %4 = vector.load %arg2[%c0_2, %c0_3] : memref<128x128xf32, #tpu.memory_space<vmem>>, vector<128x128xf32>
    %cst = arith.constant dense<0.000000e+00> : vector<8x128xf32>
    %5 = tpu.matmul %3, %4, %cst {dimension_numbers = #tpu.dot_dimension_numbers<[1], [0], [0], [1], [0, 0, 1, 1], [], []>} : vector<8x128xf32>, vector<128x128xf32>, vector<8x128xf32> -> vector<8x128xf32>
    %c0_4 = arith.constant 0 : index
    %c0_5 = arith.constant 0 : index
    %6 = vector.load %arg3[%c0_4, %c0_5] : memref<1x128xf32, #tpu.memory_space<vmem>>, vector<1x128xf32>
    %7 = vector.broadcast %6 : vector<1x128xf32> to vector<8x128xf32>
    %8 = arith.addf %5, %7 : vector<8x128xf32>
    %cst_6 = arith.constant 0.000000e+00 : f32
    %9 = vector.broadcast %cst_6 : f32 to vector<8x128xf32>
    %10 = arith.maximumf %8, %9 : vector<8x128xf32>
    %c0_7 = arith.constant 0 : index
    %c0_8 = arith.constant 0 : index
    %11 = vector.load %arg4[%c0_7, %c0_8] : memref<128x128xf32, #tpu.memory_space<vmem>>, vector<128x128xf32>
    %cst_9 = arith.constant dense<0.000000e+00> : vector<8x128xf32>
    %12 = tpu.matmul %10, %11, %cst_9 {dimension_numbers = #tpu.dot_dimension_numbers<[1], [0], [0], [1], [0, 0, 1, 1], [], []>} : vector<8x128xf32>, vector<128x128xf32>, vector<8x128xf32> -> vector<8x128xf32>
    %c0_10 = arith.constant 0 : index
    %c0_11 = arith.constant 0 : index
    %13 = vector.load %arg5[%c0_10, %c0_11] : memref<1x128xf32, #tpu.memory_space<vmem>>, vector<1x128xf32>
    %14 = vector.broadcast %13 : vector<1x128xf32> to vector<8x128xf32>
    %15 = arith.addf %12, %14 : vector<8x128xf32>
    %c0_12 = arith.constant 0 : index
    %c0_13 = arith.constant 0 : index
    %16 = vector.load %arg11[%c0_12, %c0_13] : memref<8x128xf32, #tpu.memory_space<vmem>>, vector<8x128xf32>
    tpu.vector_store %arg11[%c0_12, %c0_13], %15 {strides = array<i32>} : memref<8x128xf32, #tpu.memory_space<vmem>>, vector<8x128xf32>,
    %17 = tpu.iota {dimensions = array<i32: 0>} : vector<8x128xi32>
    %c8_i32 = arith.constant 8 : i32
    %18 = arith.muli %arg0, %c8_i32 : i32
    %19 = vector.broadcast %18 : i32 to vector<8x128xi32>
    %20 = arith.addi %17, %19 : vector<8x128xi32>
    %21 = tpu.iota {dimensions = array<i32: 1>} : vector<8x128xi32>
    %c2_i32 = arith.constant 2 : i32
    %22 = vector.broadcast %c2_i32 : i32 to vector<8x128xi32>
    %23 = arith.cmpi slt, %20, %22 : vector<8x128xi32>
    %c32_i32 = arith.constant 32 : i32
    %24 = vector.broadcast %c32_i32 : i32 to vector<8x128xi32>
    %25 = arith.cmpi slt, %21, %24 : vector<8x128xi32>
    %26 = arith.andi %23, %25 : vector<8x128xi1>
    %cst_14 = arith.constant 0.000000e+00 : f32
    %27 = vector.broadcast %cst_14 : f32 to vector<8x128xf32>
    %28 = arith.select %26, %15, %27 : vector<8x128xi1>, vector<8x128xf32>
    %c0_15 = arith.constant 0 : index
    %c0_16 = arith.constant 0 : index
    %29 = vector.load %arg14[%c0_15, %c0_16] : memref<1x128xf32, #tpu.memory_space<vmem>>, vector<1x128xf32>
    %cst_17 = arith.constant dense<0.000000e+00> : vector<128xf32>
    %30 = vector.multi_reduction <add>, %28, %cst_17 [0] : vector<8x128xf32> to vector<128xf32>
    %31 = vector.shape_cast %30 : vector<128xf32> to vector<1x128xf32>
    %32 = arith.addf %29, %31 : vector<1x128xf32>
    %c0_18 = arith.constant 0 : index
    %c0_19 = arith.constant 0 : index
    %33 = vector.load %arg14[%c0_18, %c0_19] : memref<1x128xf32, #tpu.memory_space<vmem>>, vector<1x128xf32>
    tpu.vector_store %arg14[%c0_18, %c0_19], %32 {strides = array<i32>} : memref<1x128xf32, #tpu.memory_space<vmem>>, vector<1x128xf32>,
    %c0_20 = arith.constant 0 : index
    %c0_21 = arith.constant 0 : index
    %34 = vector.load %arg15[%c0_20, %c0_21] : memref<1x128xf32, #tpu.memory_space<vmem>>, vector<1x128xf32>
    %35 = arith.mulf %28, %28 : vector<8x128xf32>
    %cst_22 = arith.constant dense<0.000000e+00> : vector<128xf32>
    %36 = vector.multi_reduction <add>, %35, %cst_22 [0] : vector<8x128xf32> to vector<128xf32>
    %37 = vector.shape_cast %36 : vector<128xf32> to vector<1x128xf32>
    %38 = arith.addf %34, %37 : vector<1x128xf32>
    %c0_23 = arith.constant 0 : index
    %c0_24 = arith.constant 0 : index
    %39 = vector.load %arg15[%c0_23, %c0_24] : memref<1x128xf32, #tpu.memory_space<vmem>>, vector<1x128xf32>
    tpu.vector_store %arg15[%c0_23, %c0_24], %38 {strides = array<i32>} : memref<1x128xf32, #tpu.memory_space<vmem>>, vector<1x128xf32>,
    %c0_25 = arith.constant 0 : index
    %c0_26 = arith.constant 0 : index
    %40 = vector.load %arg17[%c0_25, %c0_26] : memref<1x128xf32, #tpu.memory_space<vmem>>, vector<1x128xf32>
    %41 = math.absf %28 : vector<8x128xf32>
    %cst_27 = arith.constant dense<0.000000e+00> : vector<128xf32>
    %42 = vector.multi_reduction <add>, %41, %cst_27 [0] : vector<8x128xf32> to vector<128xf32>
    %43 = vector.shape_cast %42 : vector<128xf32> to vector<1x128xf32>
    %44 = arith.addf %40, %43 : vector<1x128xf32>
    %c0_28 = arith.constant 0 : index
    %c0_29 = arith.constant 0 : index
    %45 = vector.load %arg17[%c0_28, %c0_29] : memref<1x128xf32, #tpu.memory_space<vmem>>, vector<1x128xf32>
    tpu.vector_store %arg17[%c0_28, %c0_29], %44 {strides = array<i32>} : memref<1x128xf32, #tpu.memory_space<vmem>>, vector<1x128xf32>,
    %cst_30 = arith.constant 0xFF800000 : f32
    %46 = vector.broadcast %cst_30 : f32 to vector<8x128xf32>
    %47 = arith.select %26, %15, %46 : vector<8x128xi1>, vector<8x128xf32>
    %c0_31 = arith.constant 0 : index
    %c0_32 = arith.constant 0 : index
    %48 = vector.load %arg16[%c0_31, %c0_32] : memref<1x128xf32, #tpu.memory_space<vmem>>, vector<1x128xf32>
    %cst_33 = arith.constant dense<0xFF800000> : vector<128xf32>
    %49 = vector.multi_reduction <maximumf>, %47, %cst_33 [0] : vector<8x128xf32> to vector<128xf32>
    %50 = vector.shape_cast %49 : vector<128xf32> to vector<1x128xf32>
    %51 = arith.maximumf %48, %50 : vector<1x128xf32>
    %c0_34 = arith.constant 0 : index
    %c0_35 = arith.constant 0 : index
    %52 = vector.load %arg16[%c0_34, %c0_35] : memref<1x128xf32, #tpu.memory_space<vmem>>, vector<1x128xf32>
    tpu.vector_store %arg16[%c0_34, %c0_35], %51 {strides = array<i32>} : memref<1x128xf32, #tpu.memory_space<vmem>>, vector<1x128xf32>,
    %c0_36 = arith.constant 0 : index
    %c0_37 = arith.constant 0 : index
    %53 = vector.load %arg7[%c0_36, %c0_37] : memref<1x128xf32, #tpu.memory_space<vmem>>, vector<1x128xf32>
    %54 = arith.negf %53 : vector<1x128xf32>
    %55 = math.exp %54 : vector<1x128xf32>
    %cst_38 = arith.constant 1.000000e+00 : f32
    %56 = vector.broadcast %cst_38 : f32 to vector<1x128xf32>
    %57 = arith.addf %56, %55 : vector<1x128xf32>
    %58 = arith.divf %56, %57 : vector<1x128xf32>
    %59 = vector.broadcast %58 : vector<1x128xf32> to vector<8x128xf32>
    %60 = arith.mulf %59, %15 : vector<8x128xf32>
    %c0_39 = arith.constant 0 : index
    %c0_40 = arith.constant 0 : index
    %61 = vector.load %arg8[%c0_39, %c0_40] : memref<128x128xf32, #tpu.memory_space<vmem>>, vector<128x128xf32>
    %cst_41 = arith.constant dense<0.000000e+00> : vector<8x128xf32>
    %62 = tpu.matmul %60, %61, %cst_41 {dimension_numbers = #tpu.dot_dimension_numbers<[1], [0], [0], [1], [0, 0, 1, 1], [], []>} : vector<8x128xf32>, vector<128x128xf32>, vector<8x128xf32> -> vector<8x128xf32>
    %c0_42 = arith.constant 0 : index
    %c0_43 = arith.constant 0 : index
    %63 = vector.load %arg9[%c0_42, %c0_43] : memref<1x128xf32, #tpu.memory_space<vmem>>, vector<1x128xf32>
    %64 = vector.broadcast %63 : vector<1x128xf32> to vector<8x128xf32>
    %65 = arith.addf %62, %64 : vector<8x128xf32>
    %c0_44 = arith.constant 0 : index
    %c0_45 = arith.constant 0 : index
    %66 = vector.load %arg10[%c0_44, %c0_45] : memref<8x128xf32, #tpu.memory_space<vmem>>, vector<8x128xf32>
    tpu.vector_store %arg10[%c0_44, %c0_45], %65 {strides = array<i32>} : memref<8x128xf32, #tpu.memory_space<vmem>>, vector<8x128xf32>,
    %c0_i32_46 = arith.constant 0 : i32
    %67 = arith.cmpi eq, %arg0, %c0_i32_46 : i32
    %68 = arith.extui %67 : i1 to i32
    %c0_i32_47 = arith.constant 0 : i32
    %69 = arith.cmpi ne, %68, %c0_i32_47 : i32
    scf.if %69 {
      %c0_48 = arith.constant 0 : index
      %c0_49 = arith.constant 0 : index
      %70 = vector.load %arg14[%c0_48, %c0_49] : memref<1x128xf32, #tpu.memory_space<vmem>>, vector<1x128xf32>
      %71 = vector.shape_cast %70 : vector<1x128xf32> to vector<1x1x128xf32>
      %cst_50 = arith.constant dense<0.000000e+00> : vector<1xf32>
      %72 = vector.multi_reduction <add>, %71, %cst_50 [1, 2] : vector<1x1x128xf32> to vector<1xf32>
      %73 = vector.shape_cast %72 : vector<1xf32> to vector<1x1x1xf32>
      %74 = vector.extract %73[0, 0, 0] : f32 from vector<1x1x1xf32>
      %c0_51 = arith.constant 0 : index
      %c0_52 = arith.constant 0 : index
      %75 = vector.load %arg15[%c0_51, %c0_52] : memref<1x128xf32, #tpu.memory_space<vmem>>, vector<1x128xf32>
      %76 = vector.shape_cast %75 : vector<1x128xf32> to vector<1x1x128xf32>
      %cst_53 = arith.constant dense<0.000000e+00> : vector<1xf32>
      %77 = vector.multi_reduction <add>, %76, %cst_53 [1, 2] : vector<1x1x128xf32> to vector<1xf32>
      %78 = vector.shape_cast %77 : vector<1xf32> to vector<1x1x1xf32>
      %79 = vector.extract %78[0, 0, 0] : f32 from vector<1x1x1xf32>
      %c0_54 = arith.constant 0 : index
      %c0_55 = arith.constant 0 : index
      %80 = vector.load %arg17[%c0_54, %c0_55] : memref<1x128xf32, #tpu.memory_space<vmem>>, vector<1x128xf32>
      %81 = vector.shape_cast %80 : vector<1x128xf32> to vector<1x1x128xf32>
      %cst_56 = arith.constant dense<0.000000e+00> : vector<1xf32>
      %82 = vector.multi_reduction <add>, %81, %cst_56 [1, 2] : vector<1x1x128xf32> to vector<1xf32>
      %83 = vector.shape_cast %82 : vector<1xf32> to vector<1x1x1xf32>
      %84 = vector.extract %83[0, 0, 0] : f32 from vector<1x1x1xf32>
      %c0_57 = arith.constant 0 : index
      %c0_58 = arith.constant 0 : index
      %85 = vector.load %arg16[%c0_57, %c0_58] : memref<1x128xf32, #tpu.memory_space<vmem>>, vector<1x128xf32>
      %86 = vector.shape_cast %85 : vector<1x128xf32> to vector<1x1x128xf32>
      %cst_59 = arith.constant dense<0xFF800000> : vector<1xf32>
      %87 = vector.multi_reduction <maximumf>, %86, %cst_59 [1, 2] : vector<1x1x128xf32> to vector<1xf32>
      %88 = vector.shape_cast %87 : vector<1xf32> to vector<1x1x1xf32>
      %89 = vector.extract %88[0, 0, 0] : f32 from vector<1x1x1xf32>
      %cst_60 = arith.constant 1.562500e-02 : f32
      %90 = arith.mulf %74, %cst_60 : f32
      %91 = arith.mulf %74, %74 : f32
      %cst_61 = arith.constant 1.562500e-02 : f32
      %92 = arith.mulf %91, %cst_61 : f32
      %93 = arith.subf %79, %92 : f32
      %cst_62 = arith.constant 0.0158730168 : f32
      %94 = arith.mulf %93, %cst_62 : f32
      %cst_63 = arith.constant 0.000000e+00 : f32
      %95 = arith.maximumf %94, %cst_63 : f32
      %96 = math.sqrt %95 : f32
      %cst_64 = arith.constant 1.562500e-02 : f32
      %97 = arith.mulf %84, %cst_64 : f32
      %98 = tpu.iota {dimensions = array<i32: 1>} : vector<1x128xi32>
      %c0_i32_65 = arith.constant 0 : i32
      %99 = vector.broadcast %c0_i32_65 : i32 to vector<1x128xi32>
      %100 = arith.cmpi eq, %98, %99 : vector<1x128xi32>
      %c1_i32 = arith.constant 1 : i32
      %101 = vector.broadcast %c1_i32 : i32 to vector<1x128xi32>
      %102 = arith.cmpi eq, %98, %101 : vector<1x128xi32>
      %c2_i32_66 = arith.constant 2 : i32
      %103 = vector.broadcast %c2_i32_66 : i32 to vector<1x128xi32>
      %104 = arith.cmpi eq, %98, %103 : vector<1x128xi32>
      %105 = vector.broadcast %89 : f32 to vector<1x128xf32>
      %106 = vector.broadcast %97 : f32 to vector<1x128xf32>
      %107 = arith.select %104, %105, %106 : vector<1x128xi1>, vector<1x128xf32>
      %108 = vector.broadcast %96 : f32 to vector<1x128xf32>
      %109 = arith.select %102, %108, %107 : vector<1x128xi1>, vector<1x128xf32>
      %110 = vector.broadcast %90 : f32 to vector<1x128xf32>
      %111 = arith.select %100, %110, %109 : vector<1x128xi1>, vector<1x128xf32>
      %c0_67 = arith.constant 0 : index
      %c0_68 = arith.constant 0 : index
      %112 = vector.load %arg6[%c0_67, %c0_68] : memref<1x128xf32, #tpu.memory_space<vmem>>, vector<1x128xf32>
      %113 = arith.mulf %112, %111 : vector<1x128xf32>
      %114 = arith.negf %113 : vector<1x128xf32>
      %115 = math.exp %114 : vector<1x128xf32>
      %cst_69 = arith.constant 1.000000e+00 : f32
      %116 = vector.broadcast %cst_69 : f32 to vector<1x128xf32>
      %117 = arith.addf %116, %115 : vector<1x128xf32>
      %118 = arith.divf %116, %117 : vector<1x128xf32>
      %c4_i32 = arith.constant 4 : i32
      %119 = vector.broadcast %c4_i32 : i32 to vector<1x128xi32>
      %120 = arith.cmpi slt, %98, %119 : vector<1x128xi32>
      %cst_70 = arith.constant 0.000000e+00 : f32
      %121 = vector.broadcast %cst_70 : f32 to vector<1x128xf32>
      %122 = arith.select %120, %118, %121 : vector<1x128xi1>, vector<1x128xf32>
      %123 = vector.shape_cast %122 : vector<1x128xf32> to vector<1x1x128xf32>
      %cst_71 = arith.constant dense<0.000000e+00> : vector<1xf32>
      %124 = vector.multi_reduction <add>, %123, %cst_71 [1, 2] : vector<1x1x128xf32> to vector<1xf32>
      %125 = vector.shape_cast %124 : vector<1xf32> to vector<1x1x1xf32>
      %126 = vector.extract %125[0, 0, 0] : f32 from vector<1x1x1xf32>
      %cst_72 = arith.constant 2.500000e-01 : f32
      %127 = arith.mulf %cst_72, %126 : f32
      %c4_i32_73 = arith.constant 4 : i32
      %128 = vector.broadcast %c4_i32_73 : i32 to vector<1x128xi32>
      %129 = arith.cmpi eq, %98, %128 : vector<1x128xi32>
      %cst_74 = arith.constant 0.000000e+00 : f32
      %130 = vector.broadcast %127 : f32 to vector<1x128xf32>
      %131 = vector.broadcast %cst_74 : f32 to vector<1x128xf32>
      %132 = arith.select %129, %130, %131 : vector<1x128xi1>, vector<1x128xf32>
      %133 = arith.addf %122, %132 : vector<1x128xf32>
      %c0_75 = arith.constant 0 : index
      %c0_76 = arith.constant 0 : index
      %134 = vector.load %arg13[%c0_75, %c0_76] : memref<1x128xf32, #tpu.memory_space<vmem>>, vector<1x128xf32>
      tpu.vector_store %arg13[%c0_75, %c0_76], %133 {strides = array<i32>} : memref<1x128xf32, #tpu.memory_space<vmem>>, vector<1x128xf32>,
    } else {
    }
    return
  }
  func.func @transform_0(%arg0: i32) -> (i32, i32) {
    %c0_i32 = arith.constant 0 : i32
    %c0_i32_0 = arith.constant 0 : i32
    return %arg0, %c0_i32 : i32, i32
  }
  func.func @transform_1(%arg0: i32) -> (i32, i32) {
    %c0_i32 = arith.constant 0 : i32
    %c0_i32_0 = arith.constant 0 : i32
    %c0_i32_1 = arith.constant 0 : i32
    return %c0_i32, %c0_i32_0 : i32, i32
  }
  func.func @transform_2(%arg0: i32) -> (i32, i32) {
    %c0_i32 = arith.constant 0 : i32
    %c0_i32_0 = arith.constant 0 : i32
    %c0_i32_1 = arith.constant 0 : i32
    return %c0_i32, %c0_i32_0 : i32, i32
  }
  func.func @transform_3(%arg0: i32) -> (i32, i32) {
    %c0_i32 = arith.constant 0 : i32
    %c0_i32_0 = arith.constant 0 : i32
    %c0_i32_1 = arith.constant 0 : i32
    return %c0_i32, %c0_i32_0 : i32, i32
  }
  func.func @transform_4(%arg0: i32) -> (i32, i32) {
    %c0_i32 = arith.constant 0 : i32
    %c0_i32_0 = arith.constant 0 : i32
    %c0_i32_1 = arith.constant 0 : i32
    return %c0_i32, %c0_i32_0 : i32, i32
  }
  func.func @transform_5(%arg0: i32) -> (i32, i32) {
    %c0_i32 = arith.constant 0 : i32
    %c0_i32_0 = arith.constant 0 : i32
    %c0_i32_1 = arith.constant 0 : i32
    return %c0_i32, %c0_i32_0 : i32, i32
  }
  func.func @transform_6(%arg0: i32) -> (i32, i32) {
    %c0_i32 = arith.constant 0 : i32
    %c0_i32_0 = arith.constant 0 : i32
    %c0_i32_1 = arith.constant 0 : i32
    return %c0_i32, %c0_i32_0 : i32, i32
  }
  func.func @transform_7(%arg0: i32) -> (i32, i32) {
    %c0_i32 = arith.constant 0 : i32
    %c0_i32_0 = arith.constant 0 : i32
    %c0_i32_1 = arith.constant 0 : i32
    return %c0_i32, %c0_i32_0 : i32, i32
  }
  func.func @transform_8(%arg0: i32) -> (i32, i32) {
    %c0_i32 = arith.constant 0 : i32
    %c0_i32_0 = arith.constant 0 : i32
    %c0_i32_1 = arith.constant 0 : i32
    return %c0_i32, %c0_i32_0 : i32, i32
  }
  func.func @transform_9(%arg0: i32) -> (i32, i32) {
    %c0_i32 = arith.constant 0 : i32
    %c0_i32_0 = arith.constant 0 : i32
    return %arg0, %c0_i32 : i32, i32
  }
  func.func @transform_10(%arg0: i32) -> (i32, i32) {
    %c0_i32 = arith.constant 0 : i32
    %c0_i32_0 = arith.constant 0 : i32
    return %arg0, %c0_i32 : i32, i32
  }
  func.func @transform_11(%arg0: i32) -> (i32, i32) {
    %c0_i32 = arith.constant 0 : i32
    %c0_i32_0 = arith.constant 0 : i32
    %c0_i32_1 = arith.constant 0 : i32
    return %c0_i32, %c0_i32_0 : i32, i32
  }
  func.func @transform_12(%arg0: i32) -> (i32, i32) {
    %c0_i32 = arith.constant 0 : i32
    %c0_i32_0 = arith.constant 0 : i32
    %c0_i32_1 = arith.constant 0 : i32
    return %c0_i32, %c0_i32_0 : i32, i32
  }
}

</mosaic_0001>

<llo_original>
// kernel: multidisciplinary_understanding_forward.1
$region0: #{multidisciplinary_understanding_forward.1}
  #allocation0 [shape = 'u32[]', space=smem, size = 0x4, offset = 0x4, fixed_abs, tag = 'smem constant byte address 0x4 - core index']
  #allocation1 [shape = 'u32[72,128]{1,0:T(1,128)}', space=vmem, size = 0x9000, scoped, tag = 'internal scratch']
  #allocation2 [shape = 'f32[1,128]{1,0:T(1,128)}', space=vmem, size = 0x200, scoped, tag = 'scratch operand']
  #allocation3 [shape = 'f32[1,128]{1,0:T(1,128)}', space=vmem, size = 0x200, scoped, tag = 'scratch operand']
  #allocation4 [shape = 'f32[1,128]{1,0:T(1,128)}', space=vmem, size = 0x200, scoped, tag = 'scratch operand']
  #allocation5 [shape = 'f32[1,128]{1,0:T(1,128)}', space=vmem, size = 0x200, scoped, tag = 'scratch operand']
  %s0 = inlined_call_operand.vmem [shape: f32[8,128], index: 0, kind: input, shape index: {}]
  %s1 = inlined_call_operand.vmem [shape: f32[128,128], index: 1, kind: input, shape index: {}]
  %s2 = inlined_call_operand.vmem [shape: f32[1,128], index: 2, kind: input, shape index: {}]
  %s3 = inlined_call_operand.vmem [shape: f32[128,128], index: 3, kind: input, shape index: {}]
  %s4 = inlined_call_operand.vmem [shape: f32[1,128], index: 4, kind: input, shape index: {}]
  %s5 = inlined_call_operand.vmem [shape: f32[1,128], index: 5, kind: input, shape index: {}]
  %s6 = inlined_call_operand.vmem [shape: f32[1,128], index: 6, kind: input, shape index: {}]
  %s7 = inlined_call_operand.vmem [shape: f32[128,128], index: 7, kind: input, shape index: {}]
  %s8 = inlined_call_operand.vmem [shape: f32[1,128], index: 8, kind: input, shape index: {}]
  %s9 = inlined_call_operand.vmem [shape: f32[8,128], index: 9, kind: output, shape index: {0}]
  %s10 = inlined_call_operand.vmem [shape: f32[8,128], index: 10, kind: output, shape index: {1}]
  %s11 = inlined_call_operand.vmem [shape: f32[1,128], index: 11, kind: output, shape index: {2}]
  %s12 = inlined_call_operand.vmem [shape: f32[1,128], index: 12, kind: output, shape index: {3}]
  %13 = xla_tuple %s9, %s10, %s11, %s12
  %s14 = sld [smem:[#allocation0]]
  $region78: #{multidisciplinary_understanding_forward.1} parent=0
    _
  %s16 = ssub.s32 1, %s14
  %s17 = scalar_select 0, %s16, %s14
  // Predicated region
  $region2: #{multidisciplinary_understanding_forward.1} parent=0 // pred_check
    _
  $region3: #{multidisciplinary_understanding_forward.1} parent=0 // pred_check_branch
    %19 = sbr.rel (0) target = $region5
  $region4: #{multidisciplinary_understanding_forward.1} parent=0 // pred_region
    _
  $region5: #{multidisciplinary_understanding_forward.1} parent=0 // pred_fallthru
    _
  // Predicated region
  $region6: #{multidisciplinary_understanding_forward.1} parent=0 // pred_check
    _
  $region7: #{multidisciplinary_understanding_forward.1} parent=0 // pred_check_branch
    %21 = sbr.rel (0) target = $region9
  $region8: #{multidisciplinary_understanding_forward.1} parent=0 // pred_region
    _
  $region9: #{multidisciplinary_understanding_forward.1} parent=0 // pred_fallthru
    _
  // Predicated region
  $region10: #{multidisciplinary_understanding_forward.1} parent=0 // pred_check
    _
  $region11: #{multidisciplinary_understanding_forward.1} parent=0 // pred_check_branch
    %23 = sbr.rel (0) target = $region13
  $region12: #{multidisciplinary_understanding_forward.1} parent=0 // pred_region
    _
  $region13: #{multidisciplinary_understanding_forward.1} parent=0 // pred_fallthru
    _
  // Predicated region
  $region14: #{multidisciplinary_understanding_forward.1} parent=0 // pred_check
    _
  $region15: #{multidisciplinary_understanding_forward.1} parent=0 // pred_check_branch
    %25 = sbr.rel (0) target = $region17
  $region16: #{multidisciplinary_understanding_forward.1} parent=0 // pred_region
    _
  $region17: #{multidisciplinary_understanding_forward.1} parent=0 // pred_fallthru
    _
  // Predicated region
  $region18: #{multidisciplinary_understanding_forward.1} parent=0 // pred_check
    _
  $region19: #{multidisciplinary_understanding_forward.1} parent=0 // pred_check_branch
    %27 = sbr.rel (0) target = $region21
  $region20: #{multidisciplinary_understanding_forward.1} parent=0 // pred_region
    _
  $region21: #{multidisciplinary_understanding_forward.1} parent=0 // pred_fallthru
    _
  // Predicated region
  $region22: #{multidisciplinary_understanding_forward.1} parent=0 // pred_check
    _
  $region23: #{multidisciplinary_understanding_forward.1} parent=0 // pred_check_branch
    %29 = sbr.rel (0) target = $region25
  $region24: #{multidisciplinary_understanding_forward.1} parent=0 // pred_region
    _
  $region25: #{multidisciplinary_understanding_forward.1} parent=0 // pred_fallthru
    _
  // Predicated region
  $region26: #{multidisciplinary_understanding_forward.1} parent=0 // pred_check
    _
  $region27: #{multidisciplinary_understanding_forward.1} parent=0 // pred_check_branch
    %31 = sbr.rel (0) target = $region29
  $region28: #{multidisciplinary_understanding_forward.1} parent=0 // pred_region
    _
  $region29: #{multidisciplinary_understanding_forward.1} parent=0 // pred_fallthru
    _
  // Predicated region
  $region30: #{multidisciplinary_understanding_forward.1} parent=0 // pred_check
    _
  $region31: #{multidisciplinary_understanding_forward.1} parent=0 // pred_check_branch
    %33 = sbr.rel (0) target = $region33
  $region32: #{multidisciplinary_understanding_forward.1} parent=0 // pred_region
    _
  $region33: #{multidisciplinary_understanding_forward.1} parent=0 // pred_fallthru
    _
  // Predicated region
  $region34: #{multidisciplinary_understanding_forward.1} parent=0 // pred_check
    _
  $region35: #{multidisciplinary_understanding_forward.1} parent=0 // pred_check_branch
    %35 = sbr.rel (0) target = $region37
  $region36: #{multidisciplinary_understanding_forward.1} parent=0 // pred_region
    _
  $region37: #{multidisciplinary_understanding_forward.1} parent=0 // pred_fallthru
    _
  %p36 = scmp.eq.s32.totalorder 0, 0
  // Predicated region
  $region38: #{multidisciplinary_understanding_forward.1} parent=0 // pred_check
    %p37 = pneg %p36
  $region39: #{multidisciplinary_understanding_forward.1} parent=0 // pred_check_branch
    %39 = sbr.rel (%p37) target = $region41
  $region40: #{multidisciplinary_understanding_forward.1} parent=0 // pred_region
    %40 = vst [vmem:[#allocation2] sm:$0x1] 0.0
    %41 = vst [vmem:[#allocation3] sm:$0x1] 0.0
    %42 = vst [vmem:[#allocation5] sm:$0x1] 0.0
    %43 = vst [vmem:[#allocation4] sm:$0x1] -inf
    %v44 = vld [vmem:[%s6] sm:$0x1]
    %v45 = vxor.u32 %v44, 2147483648
    %v46 = vmul.f32 %v45, 1.442695
    %v47 = vpow.pop %v46
    %v48 = vadd.f32 %v47, 1.0
    %v49 = vrcp.pop %v48
    %v50 = vmul.f32 %v48, %v49
    %v51 = vsub.f32 1.0, %v50
    %v52 = vmul.f32 %v49, %v51
    %v53 = vadd.f32 %v49, %v52
    %vm54 = vweird.f32 %v48
    %vm55 = vweird.f32 %v49
    %vm56 = vmor %vm54, %vm55
    %v57 = vsel %vm56, %v49, %v53
    %v58 = vand.u32 2147483647, %v48
    %vm59 = vcmp.eq.f32.partialorder %v58, 8.507059e+37
    %v60 = vand.u32 %v48, 2147483648
    %v61 = vor.u32 1.1754944e-38, %v60
    %v62 = vsel %vm59, %v61, %v57
    %v63 = vmul.f32 1.0, %v62
    %64 = vst [vmem:[%s11] sm:$0x1] %v63
  $region41: #{multidisciplinary_understanding_forward.1} parent=0 // pred_fallthru
    _
  %v65 = vld [vmem:[%s0] sm:$0xff]
  %v66 = vld [vmem:[%s1] sm:$0xff]
  %v67 = vld [vmem:[%s1 + $0x8] sm:$0xff]
  %v68 = vld [vmem:[%s1 + $0x10] sm:$0xff]
  %v69 = vld [vmem:[%s1 + $0x18] sm:$0xff]
  %v70 = vld [vmem:[%s1 + $0x20] sm:$0xff]
  %v71 = vld [vmem:[%s1 + $0x28] sm:$0xff]
  %v72 = vld [vmem:[%s1 + $0x30] sm:$0xff]
  %v73 = vld [vmem:[%s1 + $0x38] sm:$0xff]
  %v74 = vld [vmem:[%s1 + $0x40] sm:$0xff]
  %v75 = vld [vmem:[%s1 + $0x48] sm:$0xff]
  %v76 = vld [vmem:[%s1 + $0x50] sm:$0xff]
  %v77 = vld [vmem:[%s1 + $0x58] sm:$0xff]
  %v78 = vld [vmem:[%s1 + $0x60] sm:$0xff]
  %v79 = vld [vmem:[%s1 + $0x68] sm:$0xff]
  %v80 = vld [vmem:[%s1 + $0x70] sm:$0xff]
  %v81 = vld [vmem:[%s1 + $0x78] sm:$0xff]
  %v82 = vld [vmem:[%s2] sm:$0x1]
  %v84 = vperm.slane %v82, 0
  %86 = vmatpush.msra.mxu0 %v81
  %87 = vmatpush.msra.mxu0 %v80
  %88 = vmatpush.msra.mxu0 %v79
  %89 = vmatpush.msra.mxu0 %v78
  %90 = vmatpush.msra.mxu0 %v77
  %91 = vmatpush.msra.mxu0 %v76
  %92 = vmatpush.msra.mxu0 %v75
  %93 = vmatpush.msra.mxu0 %v74
  %94 = vmatpush.msra.mxu0 %v73
  %95 = vmatpush.msra.mxu0 %v72
  %96 = vmatpush.msra.mxu0 %v71
  %97 = vmatpush.msra.mxu0 %v70
  %98 = vmatpush.msra.mxu0 %v69
  %99 = vmatpush.msra.mxu0 %v68
  %100 = vmatpush.msra.mxu0 %v67
  %101 = vmatpush.msra.mxu0 %v66
  %102 = vmatmul.f32.gmra.mxu0 %v65
  %v103 = vpop.f32.mrf.mxu0
  %v104 = vadd.f32 %v84, %v103
  %105 = vdwg.mxu0
  %v106 = vmax.f32 %v104, 0.0
  %v107 = vld [vmem:[%s3] sm:$0xff]
  %v108 = vld [vmem:[%s3 + $0x8] sm:$0xff]
  %v109 = vld [vmem:[%s3 + $0x10] sm:$0xff]
  %v110 = vld [vmem:[%s3 + $0x18] sm:$0xff]
  %v111 = vld [vmem:[%s3 + $0x20] sm:$0xff]
  %v112 = vld [vmem:[%s3 + $0x28] sm:$0xff]
  %v113 = vld [vmem:[%s3 + $0x30] sm:$0xff]
  %v114 = vld [vmem:[%s3 + $0x38] sm:$0xff]
  %v115 = vld [vmem:[%s3 + $0x40] sm:$0xff]
  %v116 = vld [vmem:[%s3 + $0x48] sm:$0xff]
  %v117 = vld [vmem:[%s3 + $0x50] sm:$0xff]
  %v118 = vld [vmem:[%s3 + $0x58] sm:$0xff]
  %v119 = vld [vmem:[%s3 + $0x60] sm:$0xff]
  %v120 = vld [vmem:[%s3 + $0x68] sm:$0xff]
  %v121 = vld [vmem:[%s3 + $0x70] sm:$0xff]
  %v122 = vld [vmem:[%s3 + $0x78] sm:$0xff]
  %v123 = vld [vmem:[%s4] sm:$0x1]
  %v125 = vperm.slane %v123, 0
  %127 = vmatpush.msra.mxu0 %v122
  %128 = vmatpush.msra.mxu0 %v121
  %129 = vmatpush.msra.mxu0 %v120
  %130 = vmatpush.msra.mxu0 %v119
  %131 = vmatpush.msra.mxu0 %v118
  %132 = vmatpush.msra.mxu0 %v117
  %133 = vmatpush.msra.mxu0 %v116
  %134 = vmatpush.msra.mxu0 %v115
  %135 = vmatpush.msra.mxu0 %v114
  %136 = vmatpush.msra.mxu0 %v113
  %137 = vmatpush.msra.mxu0 %v112
  %138 = vmatpush.msra.mxu0 %v111
  %139 = vmatpush.msra.mxu0 %v110
  %140 = vmatpush.msra.mxu0 %v109
  %141 = vmatpush.msra.mxu0 %v108
  %142 = vmatpush.msra.mxu0 %v107
  %143 = vmatmul.f32.gmra.mxu0 %v106
  %v144 = vpop.f32.mrf.mxu0
  %v145 = vadd.f32 %v125, %v144
  %146 = vdwg.mxu0
  %147 = vst [vmem:[%s10] sm:$0xff] %v145
  %v148 = vlaneseq
  %v149 = vshrl.u32 %v148, 7
  %s150 = smul.u32 0, 8
  %v151 = vstv %s150
  %v152 = vadd.s32 %v149, %v151
  %v153 = vlaneseq
  %v154 = vand.u32 %v153, 127
  %vm155 = vcmp.lt.s32.totalorder %v152, 2
  %vm156 = vcmp.lt.s32.totalorder %v154, 32
  %vm157 = vmand %vm155, %vm156
  %v158 = vsel %vm157, %v145, 0.0
  %v159 = vld [vmem:[#allocation2] sm:$0x1]
  %v160 = vrot.slane %v158, 4
  %v161 = vadd.f32 %v158, %v160
  %v162 = vrot.slane %v161, 2
  %v163 = vadd.f32 %v161, %v162
  %v164 = vrot.slane %v163, 1
  %v165 = vadd.f32 %v163, %v164
  %v166 = vadd.f32 %v159, %v165
  %167 = vst [vmem:[#allocation2] sm:$0x1] %v166
  %v168 = vld [vmem:[#allocation3] sm:$0x1]
  %v169 = vmul.f32 %v158, %v158
  %v170 = vrot.slane %v169, 4
  %v171 = vadd.f32 %v169, %v170
  %v172 = vrot.slane %v171, 2
  %v173 = vadd.f32 %v171, %v172
  %v174 = vrot.slane %v173, 1
  %v175 = vadd.f32 %v173, %v174
  %v176 = vadd.f32 %v168, %v175
  %177 = vst [vmem:[#allocation3] sm:$0x1] %v176
  %v178 = vld [vmem:[#allocation5] sm:$0x1]
  %v179 = vand.u32 2147483647, %v158
  %v180 = vrot.slane %v179, 4
  %v181 = vadd.f32 %v179, %v180
  %v182 = vrot.slane %v181, 2
  %v183 = vadd.f32 %v181, %v182
  %v184 = vrot.slane %v183, 1
  %v185 = vadd.f32 %v183, %v184
  %v186 = vadd.f32 %v178, %v185
  %187 = vst [vmem:[#allocation5] sm:$0x1] %v186
  %v188 = vsel %vm157, %v145, -inf
  %v189 = vld [vmem:[#allocation4] sm:$0x1]
  %v190 = vrot.slane %v188, 4
  %v191 = vmax.f32 %v188, %v190
  %v192 = vrot.slane %v191, 2
  %v193 = vmax.f32 %v191, %v192
  %v194 = vrot.slane %v193, 1
  %v195 = vmax.f32 %v193, %v194
  %v196 = vmax.f32 %v189, %v195
  %197 = vst [vmem:[#allocation4] sm:$0x1] %v196
  %v198 = vld [vmem:[%s6] sm:$0x1]
  %v199 = vxor.u32 %v198, 2147483648
  %v200 = vmul.f32 %v199, 1.442695
  %v201 = vpow.pop %v200
  %v202 = vadd.f32 %v201, 1.0
  %v203 = vrcp.pop %v202
  %v204 = vmul.f32 %v202, %v203
  %v205 = vsub.f32 1.0, %v204
  %v206 = vmul.f32 %v203, %v205
  %v207 = vadd.f32 %v203, %v206
  %vm208 = vweird.f32 %v202
  %vm209 = vweird.f32 %v203
  %vm210 = vmor %vm208, %vm209
  %v211 = vsel %vm210, %v203, %v207
  %v212 = vand.u32 2147483647, %v202
  %vm213 = vcmp.eq.f32.partialorder %v212, 8.507059e+37
  %v214 = vand.u32 %v202, 2147483648
  %v215 = vor.u32 1.1754944e-38, %v214
  %v216 = vsel %vm213, %v215, %v211
  %v217 = vmul.f32 1.0, %v216
  %v219 = vperm.slane %v217, 0
  %v221 = vmul.f32 %v219, %v145
  %v222 = vld [vmem:[%s7] sm:$0xff]
  %v223 = vld [vmem:[%s7 + $0x8] sm:$0xff]
  %v224 = vld [vmem:[%s7 + $0x10] sm:$0xff]
  %v225 = vld [vmem:[%s7 + $0x18] sm:$0xff]
  %v226 = vld [vmem:[%s7 + $0x20] sm:$0xff]
  %v227 = vld [vmem:[%s7 + $0x28] sm:$0xff]
  %v228 = vld [vmem:[%s7 + $0x30] sm:$0xff]
  %v229 = vld [vmem:[%s7 + $0x38] sm:$0xff]
  %v230 = vld [vmem:[%s7 + $0x40] sm:$0xff]
  %v231 = vld [vmem:[%s7 + $0x48] sm:$0xff]
  %v232 = vld [vmem:[%s7 + $0x50] sm:$0xff]
  %v233 = vld [vmem:[%s7 + $0x58] sm:$0xff]
  %v234 = vld [vmem:[%s7 + $0x60] sm:$0xff]
  %v235 = vld [vmem:[%s7 + $0x68] sm:$0xff]
  %v236 = vld [vmem:[%s7 + $0x70] sm:$0xff]
  %v237 = vld [vmem:[%s7 + $0x78] sm:$0xff]
  %v238 = vld [vmem:[%s8] sm:$0x1]
  %v240 = vperm.slane %v238, 0
  %242 = vmatpush.msra.mxu0 %v237
  %243 = vmatpush.msra.mxu0 %v236
  %244 = vmatpush.msra.mxu0 %v235
  %245 = vmatpush.msra.mxu0 %v234
  %246 = vmatpush.msra.mxu0 %v233
  %247 = vmatpush.msra.mxu0 %v232
  %248 = vmatpush.msra.mxu0 %v231
  %249 = vmatpush.msra.mxu0 %v230
  %250 = vmatpush.msra.mxu0 %v229
  %251 = vmatpush.msra.mxu0 %v228
  %252 = vmatpush.msra.mxu0 %v227
  %253 = vmatpush.msra.mxu0 %v226
  %254 = vmatpush.msra.mxu0 %v225
  %255 = vmatpush.msra.mxu0 %v224
  %256 = vmatpush.msra.mxu0 %v223
  %257 = vmatpush.msra.mxu0 %v222
  %258 = vmatmul.f32.gmra.mxu0 %v221
  %v259 = vpop.f32.mrf.mxu0
  %v260 = vadd.f32 %v240, %v259
  %261 = vdwg.mxu0
  %262 = vst [vmem:[%s9] sm:$0xff] %v260
  // Predicated region
  $region42: #{multidisciplinary_understanding_forward.1} parent=0 // pred_check
    %p263 = pneg %p36
  $region43: #{multidisciplinary_understanding_forward.1} parent=0 // pred_check_branch
    %265 = sbr.rel (%p263) target = $region45
  $region44: #{multidisciplinary_understanding_forward.1} parent=0 // pred_region
    %v266 = vld [vmem:[#allocation2] sm:$0x1]
    %vm267 = vcmask 1040384
    %v268 = vsel %vm267, %v266, 0.0
    %269 = vadd.xlane.f32.xlu0 %v268
    %v270 = vpop.xlane.xlu0 %269
    %v271 = vrot.slane %v270, 4
    %v272 = vadd.f32 %v270, %v271
    %v273 = vrot.slane %v272, 2
    %v274 = vadd.f32 %v272, %v273
    %v275 = vrot.slane %v274, 1
    %v276 = vadd.f32 %v274, %v275
    %s277 = vtos %v276
    %v278 = vld [vmem:[#allocation3] sm:$0x1]
    %v279 = vsel %vm267, %v278, 0.0
    %280 = vadd.xlane.f32.xlu0 %v279
    %v281 = vpop.xlane.xlu0 %280
    %v282 = vrot.slane %v281, 4
    %v283 = vadd.f32 %v281, %v282
    %v284 = vrot.slane %v283, 2
    %v285 = vadd.f32 %v283, %v284
    %v286 = vrot.slane %v285, 1
    %v287 = vadd.f32 %v285, %v286
    %s288 = vtos %v287
    %v289 = vld [vmem:[#allocation5] sm:$0x1]
    %v290 = vsel %vm267, %v289, 0.0
    %291 = vadd.xlane.f32.xlu0 %v290
    %v292 = vpop.xlane.xlu0 %291
    %v293 = vrot.slane %v292, 4
    %v294 = vadd.f32 %v292, %v293
    %v295 = vrot.slane %v294, 2
    %v296 = vadd.f32 %v294, %v295
    %v297 = vrot.slane %v296, 1
    %v298 = vadd.f32 %v296, %v297
    %s299 = vtos %v298
    %v300 = vld [vmem:[#allocation4] sm:$0x1]
    %v301 = vsel %vm267, %v300, -inf
    %302 = vmax.xlane.f32.xlu0 %v301
    %v303 = vpop.xlane.xlu0 %302
    %v304 = vrot.slane %v303, 4
    %v305 = vmax.f32 %v303, %v304
    %v306 = vrot.slane %v305, 2
    %v307 = vmax.f32 %v305, %v306
    %v308 = vrot.slane %v307, 1
    %v309 = vmax.f32 %v307, %v308
    %s310 = vtos %v309
    %s311 = smul.f32 %s277, 0.015625
    %s312 = smul.f32 %s277, %s277
    %s313 = smul.f32 %s312, 0.015625
    %s314 = ssub.f32 %s288, %s313
    %s315 = smul.f32 %s314, 0.015873017
    %s316 = smax.f32 %s315, 0.0
    %v317 = vstv %s316
    %v318 = vrsqrt.pop %v317
    %v319 = vmul.f32 %v318, %v317
    %v320 = vmul.f32 %v319, %v318
    %v321 = vmul.f32 0.5, %v320
    %v322 = vsub.f32 1.5, %v321
    %v323 = vmul.f32 %v318, %v322
    %v324 = vmul.f32 %v317, %v323
    %vm325 = vcmp.eq.f32.partialorder %v317, inf
    %v326 = vsel %vm325, %v317, %v324
    %vm327 = vcmp.eq.f32.partialorder %v317, 0.0
    %v328 = vand.u32 %v317, 2147483648
    %v329 = vsel %vm327, %v328, %v326
    %s330 = vtos %v329
    %s331 = smul.f32 %s299, 0.015625
    %vm332 = vcmp.eq.s32.totalorder %v154, 0
    %vm333 = vcmp.eq.s32.totalorder %v154, 1
    %vm334 = vcmp.eq.s32.totalorder %v154, 2
    %v335 = vstv %s310
    %v336 = vstv %s331
    %v337 = vsel %vm334, %v335, %v336
    %v338 = vstv %s330
    %v339 = vsel %vm333, %v338, %v337
    %v340 = vstv %s311
    %v341 = vsel %vm332, %v340, %v339
    %v342 = vld [vmem:[%s5] sm:$0x1]
    %v343 = vmul.f32 %v342, %v341
    %v344 = vxor.u32 %v343, 2147483648
    %v345 = vmul.f32 %v344, 1.442695
    %v346 = vpow.pop %v345
    %v347 = vadd.f32 %v346, 1.0
    %v348 = vrcp.pop %v347
    %v349 = vmul.f32 %v347, %v348
    %v350 = vsub.f32 1.0, %v349
    %v351 = vmul.f32 %v348, %v350
    %v352 = vadd.f32 %v348, %v351
    %vm353 = vweird.f32 %v347
    %vm354 = vweird.f32 %v348
    %vm355 = vmor %vm353, %vm354
    %v356 = vsel %vm355, %v348, %v352
    %v357 = vand.u32 2147483647, %v347
    %vm358 = vcmp.eq.f32.partialorder %v357, 8.507059e+37
    %v359 = vand.u32 %v347, 2147483648
    %v360 = vor.u32 1.1754944e-38, %v359
    %v361 = vsel %vm358, %v360, %v356
    %v362 = vmul.f32 1.0, %v361
    %vm363 = vcmp.lt.s32.totalorder %v154, 4
    %v364 = vsel %vm363, %v362, 0.0
    %v365 = vsel %vm267, %v364, 0.0
    %366 = vadd.xlane.f32.xlu0 %v365
    %v367 = vpop.xlane.xlu0 %366
    %v368 = vrot.slane %v367, 4
    %v369 = vadd.f32 %v367, %v368
    %v370 = vrot.slane %v369, 2
    %v371 = vadd.f32 %v369, %v370
    %v372 = vrot.slane %v371, 1
    %v373 = vadd.f32 %v371, %v372
    %s374 = vtos %v373
    %s375 = smul.f32 %s374, 0.25
    %vm376 = vcmp.eq.s32.totalorder %v154, 4
    %v377 = vstv %s375
    %v378 = vsel %vm376, %v377, 0.0
    %v379 = vadd.f32 %v364, %v378
    %380 = vst [vmem:[%s12] sm:$0x1] %v379
  $region45: #{multidisciplinary_understanding_forward.1} parent=0 // pred_fallthru
    _
  // Predicated region
  $region46: #{multidisciplinary_understanding_forward.1} parent=0 // pred_check
    _
  $region47: #{multidisciplinary_understanding_forward.1} parent=0 // pred_check_branch
    %382 = sbr.rel (0) target = $region49
  $region48: #{multidisciplinary_understanding_forward.1} parent=0 // pred_region
    _
  $region49: #{multidisciplinary_understanding_forward.1} parent=0 // pred_fallthru
    _
  // Predicated region
  $region50: #{multidisciplinary_understanding_forward.1} parent=0 // pred_check
    _
  $region51: #{multidisciplinary_understanding_forward.1} parent=0 // pred_check_branch
    %384 = sbr.rel (0) target = $region53
  $region52: #{multidisciplinary_understanding_forward.1} parent=0 // pred_region
    _
  $region53: #{multidisciplinary_understanding_forward.1} parent=0 // pred_fallthru
    _
  // Predicated region
  $region54: #{multidisciplinary_understanding_forward.1} parent=0 // pred_check
    _
  $region55: #{multidisciplinary_understanding_forward.1} parent=0 // pred_check_branch
    %386 = sbr.rel (0) target = $region57
  $region56: #{multidisciplinary_understanding_forward.1} parent=0 // pred_region
    _
  $region57: #{multidisciplinary_understanding_forward.1} parent=0 // pred_fallthru
    _
  // Predicated region
  $region58: #{multidisciplinary_understanding_forward.1} parent=0 // pred_check
    _
  $region59: #{multidisciplinary_understanding_forward.1} parent=0 // pred_check_branch
    %388 = sbr.rel (0) target = $region61
  $region60: #{multidisciplinary_understanding_forward.1} parent=0 // pred_region
    _
  $region61: #{multidisciplinary_understanding_forward.1} parent=0 // pred_fallthru
    _
  // Predicated region
  $region62: #{multidisciplinary_understanding_forward.1} parent=0 // pred_check
    _
  $region63: #{multidisciplinary_understanding_forward.1} parent=0 // pred_check_branch
    %390 = sbr.rel (0) target = $region65
  $region64: #{multidisciplinary_understanding_forward.1} parent=0 // pred_region
    _
  $region65: #{multidisciplinary_understanding_forward.1} parent=0 // pred_fallthru
    _
  // Predicated region
  $region66: #{multidisciplinary_understanding_forward.1} parent=0 // pred_check
    _
  $region67: #{multidisciplinary_understanding_forward.1} parent=0 // pred_check_branch
    %392 = sbr.rel (0) target = $region69
  $region68: #{multidisciplinary_understanding_forward.1} parent=0 // pred_region
    _
  $region69: #{multidisciplinary_understanding_forward.1} parent=0 // pred_fallthru
    _
  // Predicated region
  $region70: #{multidisciplinary_understanding_forward.1} parent=0 // pred_check
    _
  $region71: #{multidisciplinary_understanding_forward.1} parent=0 // pred_check_branch
    %394 = sbr.rel (0) target = $region73
  $region72: #{multidisciplinary_understanding_forward.1} parent=0 // pred_region
    _
  $region73: #{multidisciplinary_understanding_forward.1} parent=0 // pred_fallthru
    _
  // Predicated region
  $region74: #{multidisciplinary_understanding_forward.1} parent=0 // pred_check
    _
  $region75: #{multidisciplinary_understanding_forward.1} parent=0 // pred_check_branch
    %396 = sbr.rel (0) target = $region77
  $region76: #{multidisciplinary_understanding_forward.1} parent=0 // pred_region
    _
  $region77: #{multidisciplinary_understanding_forward.1} parent=0 // pred_fallthru
    _

</llo_original>
